<compile_context>
chip_gen: v7x
topology: tpu7x:2x2x1
jax: 0.10.0
libtpu: 0.0.40
codegen_flags: <defaults>
</compile_context>

<pallas_src>
import math

import jax
import jax.numpy as jnp
from jax.experimental import pallas as pl
from jax.experimental.pallas import tpu as pltpu


def _round_up(x, m):
    return (x + m - 1) // m * m


def _bilinear_kernel(s_ref, o_ref, v_ref, b_ref, out_ref, m_ref):
    # s_ref/o_ref: (TM, Np) f32;  v_ref: (Np*Np, TL) param dtype;
    # b_ref: (1, TL) f32;  out_ref: (TM, TL);  m_ref: (TM, Np*Np) VMEM scratch.
    s = s_ref[...]
    o = o_ref[...]
    n = s.shape[1]
    # Flattened outer product m[b, j*Np + k] = s[b, j] * o[b, k], rebuilt every
    # grid step (cheap VPU work hidden under the V DMA).  Built column-block by
    # column-block with lane broadcasts and static-slice stores -- avoids
    # reshape/gather lowerings entirely.  Every column is overwritten each step,
    # so the scratch never carries stale state across grid iterations.
    for j in range(n):  # static unroll over Np column blocks
        m_ref[:, j * n:(j + 1) * n] = (s[:, j:j + 1] * o).astype(m_ref.dtype)
    acc = jnp.dot(m_ref[...], v_ref[...], preferred_element_type=jnp.float32)
    out_ref[...] = (acc + b_ref[...]).astype(out_ref.dtype)


def prepare_params(V, bias, param_dtype=jnp.bfloat16):
    """Hoisted out of the hot path: call ONCE at parameter-load time.

    V: (L, N, N), bias: (L,) ->
      v_flat : (N_pad*N_pad, L_pad) param_dtype, v_flat[j*N_pad + k, l] = V[l, j, k]
      bias2d : (1, L_pad) f32
    N is zero-padded to a multiple of 16 (so N_pad^2 is a multiple of 128:
    lane-dense contraction dim); L is padded to a multiple of 128 (lane-dense
    output / bias tiles, no masked partial stores).
    """
    L, N, _ = V.shape
    N_pad = _round_up(N, 16)
    L_pad = _round_up(L, 128)
    Vp = jnp.pad(V.astype(jnp.float32), ((0, 0), (0, N_pad - N), (0, N_pad - N)))
    v_flat = jnp.transpose(Vp.reshape(L, N_pad * N_pad), (1, 0))
    v_flat = jnp.pad(v_flat, ((0, 0), (0, L_pad - L))).astype(param_dtype)
    bias2d = jnp.pad(bias.astype(jnp.float32), (0, L_pad - L)).reshape(1, L_pad)
    return v_flat, bias2d


def two_word_tensor_regression(s, o, v_flat, bias2d, sent_dim,
                               *, out_dtype=jnp.float32):
    """s, o: (B, noun_dim); v_flat/bias2d from prepare_params.

    Returns (B, sent_dim) in out_dtype.  (Pass out_dtype=jnp.bfloat16 to halve
    output HBM traffic when batch is large.)
    """
    B, N = s.shape
    NNp, L_pad = v_flat.shape
    N_pad = math.isqrt(NNp)
    assert N_pad * N_pad == NNp and N <= N_pad and L_pad % 128 == 0

    v_bytes = jnp.dtype(v_flat.dtype).itemsize
    o_bytes = jnp.dtype(out_dtype).itemsize

    # Batch tile: multiple of 8 sublanes, capped at 256 rows per MXU pass.
    TM = min(256, _round_up(B, 8))
    B_pad = _round_up(B, TM)

    # Per-generation VMEM budget (64 MiB/TC on v7x, 128 MiB on v5e/v6e).
    try:
        vmem_cap = int(pltpu.get_tpu_info().vmem_capacity_bytes)
    except Exception:  # conservative fallback if the query is unavailable
        vmem_cap = 64 * 2**20
    budget = int(vmem_cap * 0.6)

    def tile_bytes(tl):
        return (2 * 2 * TM * N_pad * 4       # s, o tiles (f32, double-buffered)
                + 2 * NNp * tl * v_bytes     # V tile (double-buffered)
                + 2 * TM * tl * o_bytes      # out tile (double-buffered)
                + 2 * tl * 4                 # bias tile
                + TM * NNp * v_bytes         # m scratch
                + TM * tl * 4)               # f32 accumulator

    # Full-V-residency fast path: a single L block means V is DMA'd exactly
    # once and stays in VMEM for the whole batch loop.
    if tile_bytes(L_pad) <= budget:
        TL = L_pad
    else:
        TL = 128
        for cand in (2048, 1024, 512, 256):
            if L_pad % cand == 0 and tile_bytes(cand) <= budget:
                TL = cand
                break
    # TODO(synk): add an innermost "arbitrary" K axis over NN_pad chunks with an
    # f32 VMEM accumulator so very large noun_dim keeps near-optimal TL instead
    # of collapsing to TL=128 or overflowing VMEM.

    l_tiles, b_tiles = L_pad // TL, B_pad // TM
    grid = (l_tiles, b_tiles)  # L OUTER: V block index is constant across the
                               # inner batch loop -> each V tile fetched once.

    s_p = jnp.pad(s.astype(jnp.float32), ((0, B_pad - B), (0, N_pad - N)))
    o_p = jnp.pad(o.astype(jnp.float32), ((0, B_pad - B), (0, N_pad - N)))

    v_spec_kwargs = {}
    if l_tiles > 2 and tile_bytes(TL) + NNp * TL * v_bytes <= budget:
        # Deeper pipelining on the critical (V) stream when VMEM allows.
        v_spec_kwargs["pipeline_mode"] = pl.Buffered(3)

    vmem_limit = int(min(int(vmem_cap * 0.9),
                         max(4 * tile_bytes(TL), 32 * 2**20)))

    out = pl.pallas_call(
        _bilinear_kernel,
        out_shape=jax.ShapeDtypeStruct((B_pad, L_pad), out_dtype),
        grid_spec=pltpu.PrefetchScalarGridSpec(
            num_scalar_prefetch=0,
            grid=grid,
            in_specs=[
                pl.BlockSpec((TM, N_pad), lambda l, b: (b, 0)),
                pl.BlockSpec((TM, N_pad), lambda l, b: (b, 0)),
                pl.BlockSpec((NNp, TL), lambda l, b: (0, l), **v_spec_kwargs),
                pl.BlockSpec((1, TL), lambda l, b: (0, l)),
            ],
            out_specs=pl.BlockSpec((TM, TL), lambda l, b: (b, l)),
            scratch_shapes=[pltpu.VMEM((TM, NNp), v_flat.dtype)],
        ),
        compiler_params=pltpu.CompilerParams(
            # L (outer) parallel -> on v7x each TensorCore streams half of V;
            # batch "arbitrary".  No cross-step scratch state is carried, so
            # any sharding / ordering is correct.
            dimension_semantics=("parallel", "arbitrary"),
            vmem_limit_bytes=vmem_limit,
        ),
        cost_estimate=pl.CostEstimate(
            flops=2 * B_pad * NNp * L_pad,
            transcendentals=0,
            bytes_accessed=(NNp * L_pad * v_bytes               # V read once
                            + l_tiles * 2 * B_pad * N_pad * 4   # s,o per L tile
                            + B_pad * L_pad * o_bytes           # output
                            + L_pad * 4),                       # bias
        ),
    )(s_p, o_p, v_flat, bias2d)

    return out[:B, :sent_dim]


def init_params(key, noun_dim, sent_dim):
    # Xavier-uniform per (noun_dim, noun_dim) slice, as in the PyTorch module.
    bound = math.sqrt(6.0 / (noun_dim + noun_dim))
    V = jax.random.uniform(
        key, (sent_dim, noun_dim, noun_dim),
        minval=-bound, maxval=bound, dtype=jnp.float32,
    )
    bias = jnp.zeros((sent_dim,), dtype=jnp.float32)
    return V, bias


if __name__ == "__main__":
    batch = 8
    noun_dim = 16
    sent_dim = 32

    root = jax.random.PRNGKey(0)
    k_v, k_s, k_o = jax.random.split(root, 3)

    V, bias = init_params(k_v, noun_dim, sent_dim)
    s = jax.random.normal(k_s, (batch, noun_dim), dtype=jnp.float32)
    o = jax.random.normal(k_o, (batch, noun_dim), dtype=jnp.float32)

    # Parameter transform done once, outside the per-call hot path (bf16 V
    # halves the dominant HBM stream; pass jnp.float32 if full precision needed).
    v_flat, bias2d = prepare_params(V, bias)

    out = two_word_tensor_regression(s, o, v_flat, bias2d, sent_dim)
    out = jax.block_until_ready(out)

    # Reference check against plain JAX einsum (same semantics as torch.einsum).
    # bf16 MXU inputs with f32 accumulation -> loosened tolerance vs. pure f32.
    ref = jnp.einsum("ljk,bj,bk->bl", V, s, o) + bias
    assert out.shape == (batch, sent_dim)
    assert jnp.allclose(out, ref, atol=1e-1, rtol=3e-2), (
        float(jnp.max(jnp.abs(out - ref))))

    print("KERNEL_OK")
</pallas_src>

<mosaic_0001>
module attributes {stable_mosaic.version = 11 : i64} {
  func.func @_bilinear_kernel(%arg0: i32, %arg1: i32, %arg2: memref<8x16xf32, #tpu.memory_space<vmem>>, %arg3: memref<8x16xf32, #tpu.memory_space<vmem>>, %arg4: memref<256x128xbf16, #tpu.memory_space<vmem>>, %arg5: memref<1x128xf32, #tpu.memory_space<vmem>>, %arg6: memref<8x128xf32, #tpu.memory_space<vmem>>, %arg7: memref<8x256xbf16, #tpu.memory_space<vmem>>) attributes {dimension_semantics = [#tpu.dimension_semantics<parallel>, #tpu.dimension_semantics<arbitrary>], iteration_bounds = array<i64: 1, 1>, scalar_prefetch = 0 : i64, scratch_operands = 1 : i64, tpu.core_type = #tpu.core_type<tc>, window_params = [{transform_indices = @transform_0, window_bounds = array<i64: 8, 16>}, {transform_indices = @transform_1, window_bounds = array<i64: 8, 16>}, {transform_indices = @transform_2, window_bounds = array<i64: 256, 128>}, {transform_indices = @transform_3, window_bounds = array<i64: 1, 128>}, {transform_indices = @transform_4, window_bounds = array<i64: 8, 128>}]} {
    %c0 = arith.constant 0 : index
    %c0_0 = arith.constant 0 : index
    %0 = vector.load %arg2[%c0, %c0_0] : memref<8x16xf32, #tpu.memory_space<vmem>>, vector<8x16xf32>
    %c0_1 = arith.constant 0 : index
    %c0_2 = arith.constant 0 : index
    %1 = vector.load %arg3[%c0_1, %c0_2] : memref<8x16xf32, #tpu.memory_space<vmem>>, vector<8x16xf32>
    %2 = vector.extract_strided_slice %0 {offsets = [0, 0], sizes = [8, 1], strides = [1, 1]} : vector<8x16xf32> to vector<8x1xf32>
    %3 = vector.broadcast %2 : vector<8x1xf32> to vector<8x16xf32>
    %4 = arith.mulf %3, %1 : vector<8x16xf32>
    %5 = arith.truncf %4 : vector<8x16xf32> to vector<8x16xbf16>
    %c0_3 = arith.constant 0 : index
    %c0_4 = arith.constant 0 : index
    %6 = vector.load %arg7[%c0_3, %c0_4] : memref<8x256xbf16, #tpu.memory_space<vmem>>, vector<8x16xbf16>
    tpu.vector_store %arg7[%c0_3, %c0_4], %5 {strides = array<i32>} : memref<8x256xbf16, #tpu.memory_space<vmem>>, vector<8x16xbf16>,
    %7 = vector.extract_strided_slice %0 {offsets = [0, 1], sizes = [8, 1], strides = [1, 1]} : vector<8x16xf32> to vector<8x1xf32>
    %8 = vector.broadcast %7 : vector<8x1xf32> to vector<8x16xf32>
    %9 = arith.mulf %8, %1 : vector<8x16xf32>
    %10 = arith.truncf %9 : vector<8x16xf32> to vector<8x16xbf16>
    %c0_5 = arith.constant 0 : index
    %c16 = arith.constant 16 : index
    %11 = vector.load %arg7[%c0_5, %c16] : memref<8x256xbf16, #tpu.memory_space<vmem>>, vector<8x16xbf16>
    tpu.vector_store %arg7[%c0_5, %c16], %10 {strides = array<i32>} : memref<8x256xbf16, #tpu.memory_space<vmem>>, vector<8x16xbf16>,
    %12 = vector.extract_strided_slice %0 {offsets = [0, 2], sizes = [8, 1], strides = [1, 1]} : vector<8x16xf32> to vector<8x1xf32>
    %13 = vector.broadcast %12 : vector<8x1xf32> to vector<8x16xf32>
    %14 = arith.mulf %13, %1 : vector<8x16xf32>
    %15 = arith.truncf %14 : vector<8x16xf32> to vector<8x16xbf16>
    %c0_6 = arith.constant 0 : index
    %c32 = arith.constant 32 : index
    %16 = vector.load %arg7[%c0_6, %c32] : memref<8x256xbf16, #tpu.memory_space<vmem>>, vector<8x16xbf16>
    tpu.vector_store %arg7[%c0_6, %c32], %15 {strides = array<i32>} : memref<8x256xbf16, #tpu.memory_space<vmem>>, vector<8x16xbf16>,
    %17 = vector.extract_strided_slice %0 {offsets = [0, 3], sizes = [8, 1], strides = [1, 1]} : vector<8x16xf32> to vector<8x1xf32>
    %18 = vector.broadcast %17 : vector<8x1xf32> to vector<8x16xf32>
    %19 = arith.mulf %18, %1 : vector<8x16xf32>
    %20 = arith.truncf %19 : vector<8x16xf32> to vector<8x16xbf16>
    %c0_7 = arith.constant 0 : index
    %c48 = arith.constant 48 : index
    %21 = vector.load %arg7[%c0_7, %c48] : memref<8x256xbf16, #tpu.memory_space<vmem>>, vector<8x16xbf16>
    tpu.vector_store %arg7[%c0_7, %c48], %20 {strides = array<i32>} : memref<8x256xbf16, #tpu.memory_space<vmem>>, vector<8x16xbf16>,
    %22 = vector.extract_strided_slice %0 {offsets = [0, 4], sizes = [8, 1], strides = [1, 1]} : vector<8x16xf32> to vector<8x1xf32>
    %23 = vector.broadcast %22 : vector<8x1xf32> to vector<8x16xf32>
    %24 = arith.mulf %23, %1 : vector<8x16xf32>
    %25 = arith.truncf %24 : vector<8x16xf32> to vector<8x16xbf16>
    %c0_8 = arith.constant 0 : index
    %c64 = arith.constant 64 : index
    %26 = vector.load %arg7[%c0_8, %c64] : memref<8x256xbf16, #tpu.memory_space<vmem>>, vector<8x16xbf16>
    tpu.vector_store %arg7[%c0_8, %c64], %25 {strides = array<i32>} : memref<8x256xbf16, #tpu.memory_space<vmem>>, vector<8x16xbf16>,
    %27 = vector.extract_strided_slice %0 {offsets = [0, 5], sizes = [8, 1], strides = [1, 1]} : vector<8x16xf32> to vector<8x1xf32>
    %28 = vector.broadcast %27 : vector<8x1xf32> to vector<8x16xf32>
    %29 = arith.mulf %28, %1 : vector<8x16xf32>
    %30 = arith.truncf %29 : vector<8x16xf32> to vector<8x16xbf16>
    %c0_9 = arith.constant 0 : index
    %c80 = arith.constant 80 : index
    %31 = vector.load %arg7[%c0_9, %c80] : memref<8x256xbf16, #tpu.memory_space<vmem>>, vector<8x16xbf16>
    tpu.vector_store %arg7[%c0_9, %c80], %30 {strides = array<i32>} : memref<8x256xbf16, #tpu.memory_space<vmem>>, vector<8x16xbf16>,
    %32 = vector.extract_strided_slice %0 {offsets = [0, 6], sizes = [8, 1], strides = [1, 1]} : vector<8x16xf32> to vector<8x1xf32>
    %33 = vector.broadcast %32 : vector<8x1xf32> to vector<8x16xf32>
    %34 = arith.mulf %33, %1 : vector<8x16xf32>
    %35 = arith.truncf %34 : vector<8x16xf32> to vector<8x16xbf16>
    %c0_10 = arith.constant 0 : index
    %c96 = arith.constant 96 : index
    %36 = vector.load %arg7[%c0_10, %c96] : memref<8x256xbf16, #tpu.memory_space<vmem>>, vector<8x16xbf16>
    tpu.vector_store %arg7[%c0_10, %c96], %35 {strides = array<i32>} : memref<8x256xbf16, #tpu.memory_space<vmem>>, vector<8x16xbf16>,
    %37 = vector.extract_strided_slice %0 {offsets = [0, 7], sizes = [8, 1], strides = [1, 1]} : vector<8x16xf32> to vector<8x1xf32>
    %38 = vector.broadcast %37 : vector<8x1xf32> to vector<8x16xf32>
    %39 = arith.mulf %38, %1 : vector<8x16xf32>
    %40 = arith.truncf %39 : vector<8x16xf32> to vector<8x16xbf16>
    %c0_11 = arith.constant 0 : index
    %c112 = arith.constant 112 : index
    %41 = vector.load %arg7[%c0_11, %c112] : memref<8x256xbf16, #tpu.memory_space<vmem>>, vector<8x16xbf16>
    tpu.vector_store %arg7[%c0_11, %c112], %40 {strides = array<i32>} : memref<8x256xbf16, #tpu.memory_space<vmem>>, vector<8x16xbf16>,
    %42 = vector.extract_strided_slice %0 {offsets = [0, 8], sizes = [8, 1], strides = [1, 1]} : vector<8x16xf32> to vector<8x1xf32>
    %43 = vector.broadcast %42 : vector<8x1xf32> to vector<8x16xf32>
    %44 = arith.mulf %43, %1 : vector<8x16xf32>
    %45 = arith.truncf %44 : vector<8x16xf32> to vector<8x16xbf16>
    %c0_12 = arith.constant 0 : index
    %c128 = arith.constant 128 : index
    %46 = vector.load %arg7[%c0_12, %c128] : memref<8x256xbf16, #tpu.memory_space<vmem>>, vector<8x16xbf16>
    tpu.vector_store %arg7[%c0_12, %c128], %45 {strides = array<i32>} : memref<8x256xbf16, #tpu.memory_space<vmem>>, vector<8x16xbf16>,
    %47 = vector.extract_strided_slice %0 {offsets = [0, 9], sizes = [8, 1], strides = [1, 1]} : vector<8x16xf32> to vector<8x1xf32>
    %48 = vector.broadcast %47 : vector<8x1xf32> to vector<8x16xf32>
    %49 = arith.mulf %48, %1 : vector<8x16xf32>
    %50 = arith.truncf %49 : vector<8x16xf32> to vector<8x16xbf16>
    %c0_13 = arith.constant 0 : index
    %c144 = arith.constant 144 : index
    %51 = vector.load %arg7[%c0_13, %c144] : memref<8x256xbf16, #tpu.memory_space<vmem>>, vector<8x16xbf16>
    tpu.vector_store %arg7[%c0_13, %c144], %50 {strides = array<i32>} : memref<8x256xbf16, #tpu.memory_space<vmem>>, vector<8x16xbf16>,
    %52 = vector.extract_strided_slice %0 {offsets = [0, 10], sizes = [8, 1], strides = [1, 1]} : vector<8x16xf32> to vector<8x1xf32>
    %53 = vector.broadcast %52 : vector<8x1xf32> to vector<8x16xf32>
    %54 = arith.mulf %53, %1 : vector<8x16xf32>
    %55 = arith.truncf %54 : vector<8x16xf32> to vector<8x16xbf16>
    %c0_14 = arith.constant 0 : index
    %c160 = arith.constant 160 : index
    %56 = vector.load %arg7[%c0_14, %c160] : memref<8x256xbf16, #tpu.memory_space<vmem>>, vector<8x16xbf16>
    tpu.vector_store %arg7[%c0_14, %c160], %55 {strides = array<i32>} : memref<8x256xbf16, #tpu.memory_space<vmem>>, vector<8x16xbf16>,
    %57 = vector.extract_strided_slice %0 {offsets = [0, 11], sizes = [8, 1], strides = [1, 1]} : vector<8x16xf32> to vector<8x1xf32>
    %58 = vector.broadcast %57 : vector<8x1xf32> to vector<8x16xf32>
    %59 = arith.mulf %58, %1 : vector<8x16xf32>
    %60 = arith.truncf %59 : vector<8x16xf32> to vector<8x16xbf16>
    %c0_15 = arith.constant 0 : index
    %c176 = arith.constant 176 : index
    %61 = vector.load %arg7[%c0_15, %c176] : memref<8x256xbf16, #tpu.memory_space<vmem>>, vector<8x16xbf16>
    tpu.vector_store %arg7[%c0_15, %c176], %60 {strides = array<i32>} : memref<8x256xbf16, #tpu.memory_space<vmem>>, vector<8x16xbf16>,
    %62 = vector.extract_strided_slice %0 {offsets = [0, 12], sizes = [8, 1], strides = [1, 1]} : vector<8x16xf32> to vector<8x1xf32>
    %63 = vector.broadcast %62 : vector<8x1xf32> to vector<8x16xf32>
    %64 = arith.mulf %63, %1 : vector<8x16xf32>
    %65 = arith.truncf %64 : vector<8x16xf32> to vector<8x16xbf16>
    %c0_16 = arith.constant 0 : index
    %c192 = arith.constant 192 : index
    %66 = vector.load %arg7[%c0_16, %c192] : memref<8x256xbf16, #tpu.memory_space<vmem>>, vector<8x16xbf16>
    tpu.vector_store %arg7[%c0_16, %c192], %65 {strides = array<i32>} : memref<8x256xbf16, #tpu.memory_space<vmem>>, vector<8x16xbf16>,
    %67 = vector.extract_strided_slice %0 {offsets = [0, 13], sizes = [8, 1], strides = [1, 1]} : vector<8x16xf32> to vector<8x1xf32>
    %68 = vector.broadcast %67 : vector<8x1xf32> to vector<8x16xf32>
    %69 = arith.mulf %68, %1 : vector<8x16xf32>
    %70 = arith.truncf %69 : vector<8x16xf32> to vector<8x16xbf16>
    %c0_17 = arith.constant 0 : index
    %c208 = arith.constant 208 : index
    %71 = vector.load %arg7[%c0_17, %c208] : memref<8x256xbf16, #tpu.memory_space<vmem>>, vector<8x16xbf16>
    tpu.vector_store %arg7[%c0_17, %c208], %70 {strides = array<i32>} : memref<8x256xbf16, #tpu.memory_space<vmem>>, vector<8x16xbf16>,
    %72 = vector.extract_strided_slice %0 {offsets = [0, 14], sizes = [8, 1], strides = [1, 1]} : vector<8x16xf32> to vector<8x1xf32>
    %73 = vector.broadcast %72 : vector<8x1xf32> to vector<8x16xf32>
    %74 = arith.mulf %73, %1 : vector<8x16xf32>
    %75 = arith.truncf %74 : vector<8x16xf32> to vector<8x16xbf16>
    %c0_18 = arith.constant 0 : index
    %c224 = arith.constant 224 : index
    %76 = vector.load %arg7[%c0_18, %c224] : memref<8x256xbf16, #tpu.memory_space<vmem>>, vector<8x16xbf16>
    tpu.vector_store %arg7[%c0_18, %c224], %75 {strides = array<i32>} : memref<8x256xbf16, #tpu.memory_space<vmem>>, vector<8x16xbf16>,
    %77 = vector.extract_strided_slice %0 {offsets = [0, 15], sizes = [8, 1], strides = [1, 1]} : vector<8x16xf32> to vector<8x1xf32>
    %78 = vector.broadcast %77 : vector<8x1xf32> to vector<8x16xf32>
    %79 = arith.mulf %78, %1 : vector<8x16xf32>
    %80 = arith.truncf %79 : vector<8x16xf32> to vector<8x16xbf16>
    %c0_19 = arith.constant 0 : index
    %c240 = arith.constant 240 : index
    %81 = vector.load %arg7[%c0_19, %c240] : memref<8x256xbf16, #tpu.memory_space<vmem>>, vector<8x16xbf16>
    tpu.vector_store %arg7[%c0_19, %c240], %80 {strides = array<i32>} : memref<8x256xbf16, #tpu.memory_space<vmem>>, vector<8x16xbf16>,
    %c0_20 = arith.constant 0 : index
    %c0_21 = arith.constant 0 : index
    %82 = vector.load %arg7[%c0_20, %c0_21] : memref<8x256xbf16, #tpu.memory_space<vmem>>, vector<8x256xbf16>
    %c0_22 = arith.constant 0 : index
    %c0_23 = arith.constant 0 : index
    %83 = vector.load %arg4[%c0_22, %c0_23] : memref<256x128xbf16, #tpu.memory_space<vmem>>, vector<256x128xbf16>
    %cst = arith.constant dense<0.000000e+00> : vector<8x128xf32>
    %84 = tpu.matmul %82, %83, %cst {dimension_numbers = #tpu.dot_dimension_numbers<[1], [0], [0], [1], [0, 0, 1, 1], [], []>} : vector<8x256xbf16>, vector<256x128xbf16>, vector<8x128xf32> -> vector<8x128xf32>
    %c0_24 = arith.constant 0 : index
    %c0_25 = arith.constant 0 : index
    %85 = vector.load %arg5[%c0_24, %c0_25] : memref<1x128xf32, #tpu.memory_space<vmem>>, vector<1x128xf32>
    %86 = vector.broadcast %85 : vector<1x128xf32> to vector<8x128xf32>
    %87 = arith.addf %84, %86 : vector<8x128xf32>
    %c0_26 = arith.constant 0 : index
    %c0_27 = arith.constant 0 : index
    %88 = vector.load %arg6[%c0_26, %c0_27] : memref<8x128xf32, #tpu.memory_space<vmem>>, vector<8x128xf32>
    tpu.vector_store %arg6[%c0_26, %c0_27], %87 {strides = array<i32>} : memref<8x128xf32, #tpu.memory_space<vmem>>, vector<8x128xf32>,
    return
  }
  func.func @transform_0(%arg0: i32, %arg1: i32) -> (i32, i32) {
    %c0_i32 = arith.constant 0 : i32
    %c0_i32_0 = arith.constant 0 : i32
    return %arg1, %c0_i32 : i32, i32
  }
  func.func @transform_1(%arg0: i32, %arg1: i32) -> (i32, i32) {
    %c0_i32 = arith.constant 0 : i32
    %c0_i32_0 = arith.constant 0 : i32
    return %arg1, %c0_i32 : i32, i32
  }
  func.func @transform_2(%arg0: i32, %arg1: i32) -> (i32, i32) {
    %c0_i32 = arith.constant 0 : i32
    %c0_i32_0 = arith.constant 0 : i32
    return %c0_i32, %arg0 : i32, i32
  }
  func.func @transform_3(%arg0: i32, %arg1: i32) -> (i32, i32) {
    %c0_i32 = arith.constant 0 : i32
    %c0_i32_0 = arith.constant 0 : i32
    return %c0_i32, %arg0 : i32, i32
  }
  func.func @transform_4(%arg0: i32, %arg1: i32) -> (i32, i32) {
    %c0_i32 = arith.constant 0 : i32
    return %arg1, %arg0 : i32, i32
  }
}

</mosaic_0001>

<llo_original>
// kernel: tpu_custom_call.1
$region0: #{tpu_custom_call.1}
  #allocation0 [shape = 'u32[]', space=smem, size = 0x4, offset = 0x4, fixed_abs, tag = 'smem constant byte address 0x4 - core index']
  #allocation1 [shape = 'u32[144,128]{1,0:T(1,128)}', space=vmem, size = 0x12000, scoped, tag = 'internal scratch']
  #allocation2 [shape = 'bf16[8,256]{1,0:T(8,128)(2,1)}', space=vmem, size = 0x1000, scoped, tag = 'scratch operand']
  %s0 = inlined_call_operand.hbm [shape: f32[8,16], index: 0, kind: input, shape index: {}]
  %s1 = inlined_call_operand.hbm [shape: f32[8,16], index: 1, kind: input, shape index: {}]
  %s2 = inlined_call_operand.hbm [shape: bf16[256,128], index: 2, kind: input, shape index: {}]
  %s3 = inlined_call_operand.vmem [shape: f32[1,128], index: 3, kind: input, shape index: {}]
  %s4 = inlined_call_operand.hbm [shape: f32[8,128], index: 4, kind: output, shape index: {}]
  %s5 = sld [smem:[#allocation0]]
  $region38: #{tpu_custom_call.1} parent=0
    _
  %s7 = ssub.s32 1, %s5
  %s8 = scalar_select 0, %s7, %s5
  $region1: #{tpu_custom_call.1} parent=0
    #allocation3 [shape = 'u8[4096]{0}', space=vmem, size = 0x1000, scoped, tag = 'input window, operand 0, single buffered']
    #allocation4 [shape = 's32[1]{0}', space=sflag, size = 0x4, scoped, tag = 'scoped memory for tpu_custom_call.1']
    #allocation5 [shape = 's32[1]{0}', space=sflag, size = 0x4, scoped, tag = 'scoped memory for tpu_custom_call.1']
    #allocation6 [shape = 'u8[4096]{0}', space=vmem, size = 0x1000, scoped, tag = 'input window, operand 1, single buffered']
    #allocation7 [shape = 's32[1]{0}', space=sflag, size = 0x4, scoped, tag = 'scoped memory for tpu_custom_call.1']
    #allocation8 [shape = 'u8[65536]{0}', space=vmem, size = 0x10000, scoped, tag = 'input window, operand 2, single buffered']
    #allocation9 [shape = 'u8[4096]{0}', space=vmem, size = 0x1000, scoped, tag = 'output window, operand 0, single buffered']
    %9 = vsyncpa [#allocation4], 0
    %10 = vsyncpa [#allocation7], 0
    %11 = vsyncpa [#allocation5], 0
    // Predicated region
    $region2: #{tpu_custom_call.1} parent=1 // pred_check
      _
    $region3: #{tpu_custom_call.1} parent=1 // pred_check_branch
      %13 = sbr.rel (0) target = $region5
    $region4: #{tpu_custom_call.1} parent=1 // pred_region
      %s15 = ssub.s32 128, 128
      %16 = vsyncadd [#allocation4], %s15
      %s18 = sshll.u32 [#allocation3], 4
      %s19 = int_to_ptr.vmem [resolvable:$true] %s18
      %21 = dma.hbm_to_vmem [thread:$0]  %s0, 128, %s19, [#allocation4]
    $region5: #{tpu_custom_call.1} parent=1 // pred_fallthru
      _
    // Predicated region
    $region6: #{tpu_custom_call.1} parent=1 // pred_check
      _
    $region7: #{tpu_custom_call.1} parent=1 // pred_check_branch
      %23 = sbr.rel (0) target = $region9
    $region8: #{tpu_custom_call.1} parent=1 // pred_region
      %s25 = ssub.s32 128, 128
      %26 = vsyncadd [#allocation7], %s25
      %s28 = sshll.u32 [#allocation6], 4
      %s29 = int_to_ptr.vmem [resolvable:$true] %s28
      %31 = dma.hbm_to_vmem [thread:$0]  %s1, 128, %s29, [#allocation7]
    $region9: #{tpu_custom_call.1} parent=1 // pred_fallthru
      _
    // Predicated region
    $region10: #{tpu_custom_call.1} parent=1 // pred_check
      _
    $region11: #{tpu_custom_call.1} parent=1 // pred_check_branch
      %33 = sbr.rel (0) target = $region13
    $region12: #{tpu_custom_call.1} parent=1 // pred_region
      %s35 = ssub.s32 2048, 2048
      %36 = vsyncadd [#allocation7], %s35
      %s37 = sshll.u32 [#allocation8], 4
      %s38 = int_to_ptr.vmem [resolvable:$true] %s37
      %43 = dma.hbm_to_vmem [thread:$0]  %s2, 2048, %s38, [#allocation7], 64, 64, 4
    $region13: #{tpu_custom_call.1} parent=1 // pred_fallthru
      _
    // Predicated region
    $region14: #{tpu_custom_call.1} parent=1 // pred_check
      _
    $region15: #{tpu_custom_call.1} parent=1 // pred_check_branch
      %45 = sbr.rel (0) target = $region17
    $region16: #{tpu_custom_call.1} parent=1 // pred_region
      _
    $region17: #{tpu_custom_call.1} parent=1 // pred_fallthru
      _
    // Predicated region
    $region18: #{tpu_custom_call.1} parent=1 // pred_check
      _
    $region19: #{tpu_custom_call.1} parent=1 // pred_check_branch
      %47 = sbr.rel (0) target = $region21
    $region20: #{tpu_custom_call.1} parent=1 // pred_region
      %48 = dma.done [#allocation4], 128
    $region21: #{tpu_custom_call.1} parent=1 // pred_fallthru
      _
    // Predicated region
    $region22: #{tpu_custom_call.1} parent=1 // pred_check
      _
    $region23: #{tpu_custom_call.1} parent=1 // pred_check_branch
      %50 = sbr.rel (0) target = $region25
    $region24: #{tpu_custom_call.1} parent=1 // pred_region
      %51 = dma.done [#allocation7], 128
    $region25: #{tpu_custom_call.1} parent=1 // pred_fallthru
      _
    // Predicated region
    $region26: #{tpu_custom_call.1} parent=1 // pred_check
      _
    $region27: #{tpu_custom_call.1} parent=1 // pred_check_branch
      %53 = sbr.rel (0) target = $region29
    $region28: #{tpu_custom_call.1} parent=1 // pred_region
      %54 = dma.done [#allocation7], 2048
    $region29: #{tpu_custom_call.1} parent=1 // pred_fallthru
      _
    %v56 = vld [vmem:[#allocation3] sm:$0xff]
    %v57 = vld [vmem:[#allocation6] sm:$0xff]
    %59 = vset.pattern.permute.xlu0 0
    %60 = vperm.xlu0 %59, %v56
    %v61 = vpop.permute.xlu0 %60
    %v63 = vmul.f32 %v61, %v57
    %v64 = vpack.c.bf16 %v63, %v63
    %vm65 = vcmask 125952
    %66 = vst.msk [vmem:[#allocation2] sm:$0xf] %vm65, %v64
    %67 = vset.pattern.permute.xlu0 1
    %68 = vperm.xlu0 %67, %v56
    %v69 = vpop.permute.xlu0 %68
    %v71 = vmul.f32 %v69, %v57
    %v72 = vpack.c.bf16 %v71, %v71
    %v74 = vunpack.c.l.b16 %v72
    %v75 = vpack.c.b16 %v74, %v74
    %76 = vrot.lane.b32.xlu0 %v75, 16
    %v77 = vpop.permute.xlu0 %76
    %vm79 = vcmask 257152
    %80 = vst.msk [vmem:[#allocation2] sm:$0xf] %vm79, %v77
    %81 = vset.pattern.permute.xlu0 2
    %82 = vperm.xlu0 %81, %v56
    %v83 = vpop.permute.xlu0 %82
    %v85 = vmul.f32 %v83, %v57
    %v86 = vpack.c.bf16 %v85, %v85
    %v88 = vunpack.c.l.b16 %v86
    %v89 = vpack.c.b16 %v88, %v88
    %90 = vrot.lane.b32.xlu0 %v89, 32
    %v91 = vpop.permute.xlu0 %90
    %vm93 = vcmask 388352
    %94 = vst.msk [vmem:[#allocation2] sm:$0xf] %vm93, %v91
    %95 = vset.pattern.permute.xlu0 3
    %96 = vperm.xlu0 %95, %v56
    %v97 = vpop.permute.xlu0 %96
    %v99 = vmul.f32 %v97, %v57
    %v100 = vpack.c.bf16 %v99, %v99
    %v102 = vunpack.c.l.b16 %v100
    %v103 = vpack.c.b16 %v102, %v102
    %104 = vrot.lane.b32.xlu0 %v103, 48
    %v105 = vpop.permute.xlu0 %104
    %vm107 = vcmask 519552
    %108 = vst.msk [vmem:[#allocation2] sm:$0xf] %vm107, %v105
    %109 = vset.pattern.permute.xlu0 4
    %110 = vperm.xlu0 %109, %v56
    %v111 = vpop.permute.xlu0 %110
    %v113 = vmul.f32 %v111, %v57
    %v114 = vpack.c.bf16 %v113, %v113
    %v116 = vunpack.c.l.b16 %v114
    %v117 = vpack.c.b16 %v116, %v116
    %118 = vrot.lane.b32.xlu0 %v117, 64
    %v119 = vpop.permute.xlu0 %118
    %vm121 = vcmask 650752
    %122 = vst.msk [vmem:[#allocation2] sm:$0xf] %vm121, %v119
    %123 = vset.pattern.permute.xlu0 5
    %124 = vperm.xlu0 %123, %v56
    %v125 = vpop.permute.xlu0 %124
    %v127 = vmul.f32 %v125, %v57
    %v128 = vpack.c.bf16 %v127, %v127
    %v130 = vunpack.c.l.b16 %v128
    %v131 = vpack.c.b16 %v130, %v130
    %132 = vrot.lane.b32.xlu0 %v131, 80
    %v133 = vpop.permute.xlu0 %132
    %vm135 = vcmask 781952
    %136 = vst.msk [vmem:[#allocation2] sm:$0xf] %vm135, %v133
    %137 = vset.pattern.permute.xlu0 6
    %138 = vperm.xlu0 %137, %v56
    %v139 = vpop.permute.xlu0 %138
    %v141 = vmul.f32 %v139, %v57
    %v142 = vpack.c.bf16 %v141, %v141
    %v144 = vunpack.c.l.b16 %v142
    %v145 = vpack.c.b16 %v144, %v144
    %146 = vrot.lane.b32.xlu0 %v145, 96
    %v147 = vpop.permute.xlu0 %146
    %vm149 = vcmask 913152
    %150 = vst.msk [vmem:[#allocation2] sm:$0xf] %vm149, %v147
    %151 = vset.pattern.permute.xlu0 7
    %152 = vperm.xlu0 %151, %v56
    %v153 = vpop.permute.xlu0 %152
    %v155 = vmul.f32 %v153, %v57
    %v156 = vpack.c.bf16 %v155, %v155
    %v158 = vunpack.c.l.b16 %v156
    %v159 = vpack.c.b16 %v158, %v158
    %160 = vrot.lane.b32.xlu0 %v159, 112
    %v161 = vpop.permute.xlu0 %160
    %vm163 = vcmask 1044352
    %164 = vst.msk [vmem:[#allocation2] sm:$0xf] %vm163, %v161
    %165 = vset.pattern.permute.xlu0 8
    %166 = vperm.xlu0 %165, %v56
    %v167 = vpop.permute.xlu0 %166
    %v169 = vmul.f32 %v167, %v57
    %v170 = vpack.c.bf16 %v169, %v169
    %171 = vst.msk [vmem:[#allocation2 + $0x4] sm:$0xf] %vm65, %v170
    %172 = vset.pattern.permute.xlu0 9
    %173 = vperm.xlu0 %172, %v56
    %v174 = vpop.permute.xlu0 %173
    %v176 = vmul.f32 %v174, %v57
    %v177 = vpack.c.bf16 %v176, %v176
    %v179 = vunpack.c.l.b16 %v177
    %v180 = vpack.c.b16 %v179, %v179
    %181 = vrot.lane.b32.xlu0 %v180, 16
    %v182 = vpop.permute.xlu0 %181
    %184 = vst.msk [vmem:[#allocation2 + $0x4] sm:$0xf] %vm79, %v182
    %185 = vset.pattern.permute.xlu0 10
    %186 = vperm.xlu0 %185, %v56
    %v187 = vpop.permute.xlu0 %186
    %v189 = vmul.f32 %v187, %v57
    %v190 = vpack.c.bf16 %v189, %v189
    %v192 = vunpack.c.l.b16 %v190
    %v193 = vpack.c.b16 %v192, %v192
    %194 = vrot.lane.b32.xlu0 %v193, 32
    %v195 = vpop.permute.xlu0 %194
    %197 = vst.msk [vmem:[#allocation2 + $0x4] sm:$0xf] %vm93, %v195
    %198 = vset.pattern.permute.xlu0 11
    %199 = vperm.xlu0 %198, %v56
    %v200 = vpop.permute.xlu0 %199
    %v202 = vmul.f32 %v200, %v57
    %v203 = vpack.c.bf16 %v202, %v202
    %v205 = vunpack.c.l.b16 %v203
    %v206 = vpack.c.b16 %v205, %v205
    %207 = vrot.lane.b32.xlu0 %v206, 48
    %v208 = vpop.permute.xlu0 %207
    %210 = vst.msk [vmem:[#allocation2 + $0x4] sm:$0xf] %vm107, %v208
    %211 = vset.pattern.permute.xlu0 12
    %212 = vperm.xlu0 %211, %v56
    %v213 = vpop.permute.xlu0 %212
    %v215 = vmul.f32 %v213, %v57
    %v216 = vpack.c.bf16 %v215, %v215
    %v218 = vunpack.c.l.b16 %v216
    %v219 = vpack.c.b16 %v218, %v218
    %220 = vrot.lane.b32.xlu0 %v219, 64
    %v221 = vpop.permute.xlu0 %220
    %223 = vst.msk [vmem:[#allocation2 + $0x4] sm:$0xf] %vm121, %v221
    %224 = vset.pattern.permute.xlu0 13
    %225 = vperm.xlu0 %224, %v56
    %v226 = vpop.permute.xlu0 %225
    %v228 = vmul.f32 %v226, %v57
    %v229 = vpack.c.bf16 %v228, %v228
    %v231 = vunpack.c.l.b16 %v229
    %v232 = vpack.c.b16 %v231, %v231
    %233 = vrot.lane.b32.xlu0 %v232, 80
    %v234 = vpop.permute.xlu0 %233
    %236 = vst.msk [vmem:[#allocation2 + $0x4] sm:$0xf] %vm135, %v234
    %237 = vset.pattern.permute.xlu0 14
    %238 = vperm.xlu0 %237, %v56
    %v239 = vpop.permute.xlu0 %238
    %v241 = vmul.f32 %v239, %v57
    %v242 = vpack.c.bf16 %v241, %v241
    %v244 = vunpack.c.l.b16 %v242
    %v245 = vpack.c.b16 %v244, %v244
    %246 = vrot.lane.b32.xlu0 %v245, 96
    %v247 = vpop.permute.xlu0 %246
    %249 = vst.msk [vmem:[#allocation2 + $0x4] sm:$0xf] %vm149, %v247
    %250 = vset.pattern.permute.xlu0 15
    %251 = vperm.xlu0 %250, %v56
    %v252 = vpop.permute.xlu0 %251
    %v254 = vmul.f32 %v252, %v57
    %v255 = vpack.c.bf16 %v254, %v254
    %v257 = vunpack.c.l.b16 %v255
    %v258 = vpack.c.b16 %v257, %v257
    %259 = vrot.lane.b32.xlu0 %v258, 112
    %v260 = vpop.permute.xlu0 %259
    %262 = vst.msk [vmem:[#allocation2 + $0x4] sm:$0xf] %vm163, %v260
    %v263 = vld [vmem:[#allocation2] sm:$0xff]
    %v264 = vld [vmem:[#allocation8] sm:$0xf]
    %v265 = vld [vmem:[#allocation8 + $0x4] sm:$0xf]
    %v266 = vld [vmem:[#allocation8 + $0x8] sm:$0xf]
    %v267 = vld [vmem:[#allocation8 + $0xc] sm:$0xf]
    %v268 = vld [vmem:[#allocation8 + $0x10] sm:$0xf]
    %v269 = vld [vmem:[#allocation8 + $0x14] sm:$0xf]
    %v270 = vld [vmem:[#allocation8 + $0x18] sm:$0xf]
    %v271 = vld [vmem:[#allocation8 + $0x1c] sm:$0xf]
    %v272 = vld [vmem:[#allocation8 + $0x20] sm:$0xf]
    %v273 = vld [vmem:[#allocation8 + $0x24] sm:$0xf]
    %v274 = vld [vmem:[#allocation8 + $0x28] sm:$0xf]
    %v275 = vld [vmem:[#allocation8 + $0x2c] sm:$0xf]
    %v276 = vld [vmem:[#allocation8 + $0x30] sm:$0xf]
    %v277 = vld [vmem:[#allocation8 + $0x34] sm:$0xf]
    %v278 = vld [vmem:[#allocation8 + $0x38] sm:$0xf]
    %v279 = vld [vmem:[#allocation8 + $0x3c] sm:$0xf]
    %v280 = vld [vmem:[#allocation8 + $0x40] sm:$0xf]
    %v281 = vld [vmem:[#allocation8 + $0x44] sm:$0xf]
    %v282 = vld [vmem:[#allocation8 + $0x48] sm:$0xf]
    %v283 = vld [vmem:[#allocation8 + $0x4c] sm:$0xf]
    %v284 = vld [vmem:[#allocation8 + $0x50] sm:$0xf]
    %v285 = vld [vmem:[#allocation8 + $0x54] sm:$0xf]
    %v286 = vld [vmem:[#allocation8 + $0x58] sm:$0xf]
    %v287 = vld [vmem:[#allocation8 + $0x5c] sm:$0xf]
    %v288 = vld [vmem:[#allocation8 + $0x60] sm:$0xf]
    %v289 = vld [vmem:[#allocation8 + $0x64] sm:$0xf]
    %v290 = vld [vmem:[#allocation8 + $0x68] sm:$0xf]
    %v291 = vld [vmem:[#allocation8 + $0x6c] sm:$0xf]
    %v292 = vld [vmem:[#allocation8 + $0x70] sm:$0xf]
    %v293 = vld [vmem:[#allocation8 + $0x74] sm:$0xf]
    %v294 = vld [vmem:[#allocation8 + $0x78] sm:$0xf]
    %v295 = vld [vmem:[#allocation8 + $0x7c] sm:$0xf]
    %v296 = vld [vmem:[%s3] sm:$0x1]
    %v298 = vlaneseq
    %v299 = vshrl.u32 %v298, 7
    %v300 = vsub.s32 0, %v299
    %v301 = vrot.slane %v296, %v300
    %v304 = vunpack.c.l.b16 %v263
    %v305 = vunpack.c.h.b16 %v263
    %v306 = vpack.c.b16 %v304, %v304
    %v307 = vpack.c.b16 %v305, %v305
    %v342 = vunpack.c.l.b16 %v264
    %v343 = vunpack.c.l.b16 %v265
    %v344 = vunpack.c.l.b16 %v266
    %v345 = vunpack.c.l.b16 %v267
    %v346 = vunpack.c.l.b16 %v268
    %v347 = vunpack.c.l.b16 %v269
    %v348 = vunpack.c.l.b16 %v270
    %v349 = vunpack.c.l.b16 %v271
    %v350 = vunpack.c.l.b16 %v272
    %v351 = vunpack.c.l.b16 %v273
    %v352 = vunpack.c.l.b16 %v274
    %v353 = vunpack.c.l.b16 %v275
    %v354 = vunpack.c.l.b16 %v276
    %v355 = vunpack.c.l.b16 %v277
    %v356 = vunpack.c.l.b16 %v278
    %v357 = vunpack.c.l.b16 %v279
    %v358 = vunpack.c.l.b16 %v280
    %v359 = vunpack.c.l.b16 %v281
    %v360 = vunpack.c.l.b16 %v282
    %v361 = vunpack.c.l.b16 %v283
    %v362 = vunpack.c.l.b16 %v284
    %v363 = vunpack.c.l.b16 %v285
    %v364 = vunpack.c.l.b16 %v286
    %v365 = vunpack.c.l.b16 %v287
    %v366 = vunpack.c.l.b16 %v288
    %v367 = vunpack.c.l.b16 %v289
    %v368 = vunpack.c.l.b16 %v290
    %v369 = vunpack.c.l.b16 %v291
    %v370 = vunpack.c.l.b16 %v292
    %v371 = vunpack.c.l.b16 %v293
    %v372 = vunpack.c.l.b16 %v294
    %v373 = vunpack.c.l.b16 %v295
    %v374 = vpack.c.b16 %v343, %v342
    %v375 = vpack.c.b16 %v345, %v344
    %v376 = vpack.c.b16 %v347, %v346
    %v377 = vpack.c.b16 %v349, %v348
    %v378 = vpack.c.b16 %v351, %v350
    %v379 = vpack.c.b16 %v353, %v352
    %v380 = vpack.c.b16 %v355, %v354
    %v381 = vpack.c.b16 %v357, %v356
    %v382 = vpack.c.b16 %v359, %v358
    %v383 = vpack.c.b16 %v361, %v360
    %v384 = vpack.c.b16 %v363, %v362
    %v385 = vpack.c.b16 %v365, %v364
    %v386 = vpack.c.b16 %v367, %v366
    %v387 = vpack.c.b16 %v369, %v368
    %v388 = vpack.c.b16 %v371, %v370
    %v389 = vpack.c.b16 %v373, %v372
    %406 = vmatprep.subr.bf16.mxu0 0
    %407 = vmatpush1.bf16.msra.mxu0 %v374
    %408 = vmatprep.subr.bf16.mxu0 0
    %409 = vmatpush1.bf16.msra.mxu0 %v375
    %410 = vmatprep.subr.bf16.mxu0 0
    %411 = vmatpush1.bf16.msra.mxu0 %v376
    %412 = vmatprep.subr.bf16.mxu0 0
    %413 = vmatpush1.bf16.msra.mxu0 %v377
    %414 = vmatprep.subr.bf16.mxu0 0
    %415 = vmatpush1.bf16.msra.mxu0 %v378
    %416 = vmatprep.subr.bf16.mxu0 0
    %417 = vmatpush1.bf16.msra.mxu0 %v379
    %418 = vmatprep.subr.bf16.mxu0 0
    %419 = vmatpush1.bf16.msra.mxu0 %v380
    %420 = vmatprep.subr.bf16.mxu0 0
    %421 = vmatpush1.bf16.msra.mxu0 %v381
    %422 = vmatprep.subr.bf16.mxu0 0
    %423 = vmatpush1.bf16.msra.mxu0 %v382
    %424 = vmatprep.subr.bf16.mxu0 0
    %425 = vmatpush1.bf16.msra.mxu0 %v383
    %426 = vmatprep.subr.bf16.mxu0 0
    %427 = vmatpush1.bf16.msra.mxu0 %v384
    %428 = vmatprep.subr.bf16.mxu0 0
    %429 = vmatpush1.bf16.msra.mxu0 %v385
    %430 = vmatprep.subr.bf16.mxu0 0
    %431 = vmatpush1.bf16.msra.mxu0 %v386
    %432 = vmatprep.subr.bf16.mxu0 0
    %433 = vmatpush1.bf16.msra.mxu0 %v387
    %434 = vmatprep.subr.bf16.mxu0 0
    %435 = vmatpush1.bf16.msra.mxu0 %v388
    %436 = vmatprep.subr.bf16.mxu0 0
    %437 = vmatpush1.bf16.msra.mxu0 %v389
    %438 = vmatprep.mubr.bf16.mxu0 %v307
    %439 = vmatmul.mubr.bf16.gmra.mrb[0].mxu0 %v306
    %v440 = vpop.f32.mrb[0].mxu0
    %v441 = vadd.f32 %v301, %v440
    %v442 = vpop.f32.mrb[0].mxu0
    %v443 = vpop.f32.mrb[0].mxu0
    %v444 = vpop.f32.mrb[0].mxu0
    %445 = vdwg.mxu0
    %446 = vst [vmem:[#allocation9] sm:$0xff] %v441
    // Predicated region
    $region30: #{tpu_custom_call.1} parent=1 // pred_check
      _
    $region31: #{tpu_custom_call.1} parent=1 // pred_check_branch
      %448 = sbr.rel (0) target = $region33
    $region32: #{tpu_custom_call.1} parent=1 // pred_region
      %s450 = ssub.s32 128, 128
      %451 = vsyncadd [#allocation5], %s450
      %s453 = sshll.u32 [#allocation9], 4
      %s454 = int_to_ptr.vmem [resolvable:$true] %s453
      %456 = dma.vmem_to_hbm [thread:$0]  %s454, 128, %s4, [#allocation5]
    $region33: #{tpu_custom_call.1} parent=1 // pred_fallthru
      _
    // Predicated region
    $region34: #{tpu_custom_call.1} parent=1 // pred_check
      _
    $region35: #{tpu_custom_call.1} parent=1 // pred_check_branch
      %458 = sbr.rel (0) target = $region37
    $region36: #{tpu_custom_call.1} parent=1 // pred_region
      %459 = dma.done [#allocation5], 128
    $region37: #{tpu_custom_call.1} parent=1 // pred_fallthru
      _
    %460 = vsyncpa [#allocation4], 1
    %461 = vsyncpa [#allocation7], 1
    %462 = vsyncpa [#allocation5], 1

</llo_original>
